<compile_context>
chip_gen: v5e
topology: v5e:2x2
jax: 0.10.0
libtpu: 0.0.40
codegen_flags: <defaults>
</compile_context>

<pallas_src>
import jax
import jax.numpy as jnp
from jax import lax
from jax.experimental import pallas as pl
from jax.experimental.pallas import tpu as pltpu


def _upsample1d_kernel(x_ref, w_ref, b_ref, cp_ref, cn_ref, se_ref, so_ref, y_ref):
    # x_ref:  (1, C, TL)    input tile (NCL layout, L on lanes)
    # w_ref:  (4C, C)       fused weight rows = [W1^T; W2^T; W3^T; W0^T]
    # b_ref:  (C, 1)        bias column
    # cp_ref: (1, 1, C, 1)  W3^T @ x[:, tile_start - 1]  (zeros at the left edge)
    # cn_ref: (1, 1, C, 1)  W0^T @ x[:, tile_end]        (zeros at the right edge)
    # se_ref: (CH, 2CH)     0/1 spread: output-chunk column 2k   <- row k  (even stream)
    # so_ref: (CH, 2CH)     0/1 spread: output-chunk column 2k+1 <- row k  (odd stream)
    # y_ref:  (1, C, 2TL)   interleaved output tile
    x = x_ref[0]                               # (C, TL)
    C, TL = x.shape
    CH = se_ref.shape[0]                       # riffle chunk (128, or TL when TL < 128)

    # One MXU matmul produces all four tap products.
    p = jnp.dot(w_ref[...], x, preferred_element_type=jnp.float32)   # (4C, TL)
    p1 = p[0 * C:1 * C]                        # W1^T @ x   -> even, same column
    p2 = p[1 * C:2 * C]                        # W2^T @ x   -> odd,  same column
    p3 = p[2 * C:3 * C]                        # W3^T @ x   -> even, shifted right by 1
    p0 = p[3 * C:4 * C]                        # W0^T @ x   -> odd,  shifted left by 1

    cp = cp_ref[0, 0]                          # (C, 1)
    cn = cn_ref[0, 0]                          # (C, 1)

    # Shift the *products* by one lane; the halo column supplies the cross-tile term.
    p3s = jnp.concatenate([cp, p3[:, :TL - 1]], axis=1)    # p3 shifted right by 1
    p0s = jnp.concatenate([p0[:, 1:], cn], axis=1)         # p0 shifted left by 1

    even = p1 + p3s                            # (C, TL)  values for y[2m]
    odd = p2 + p0s                             # (C, TL)  values for y[2m+1]
    b = b_ref[...]                             # (C, 1), broadcasts over lanes
    se = se_ref[...]
    so = so_ref[...]

    # Riffle even/odd into the interleaved output, one 128-lane chunk at a time, with two
    # 0/1 spread matmuls: y[:, 2k] = even[:, k], y[:, 2k+1] = odd[:, k].
    for c in range(TL // CH):
        e_c = even[:, c * CH:(c + 1) * CH]
        o_c = odd[:, c * CH:(c + 1) * CH]
        y_c = (jnp.dot(e_c, se, preferred_element_type=jnp.float32)
               + jnp.dot(o_c, so, preferred_element_type=jnp.float32)
               + b)
        y_ref[0, :, 2 * c * CH:2 * (c + 1) * CH] = y_c.astype(y_ref.dtype)


def _pick_tile_l(L, C):
    # Largest lane-dense tile (multiple of 128) that divides L while keeping the
    # double-buffered per-step VMEM footprint bounded; falls back to the full length.
    candidates = [tl for tl in (512, 256, 128) if L % tl == 0]
    for tl in candidates:
        if 60 * C * tl + 32 * C * C <= 36 * 1024 * 1024:
            return tl
    if candidates:
        return candidates[-1]
    return L


def upsample1d(x_ncl, weight, bias):
    """x_ncl: (N, C, L); weight: (C_in, C_out, 4); bias: (C_out,).
    Returns (N, C, 2*L) float32, matching nn.ConvTranspose1d(dim, dim, 4, 2, 1)."""
    N, C, L = x_ncl.shape
    TL = _pick_tile_l(L, C)
    nt = L // TL
    CH = 128 if TL % 128 == 0 else TL

    xf = x_ncl.astype(jnp.float32)

    # Fused, lane-dense weight: rows [W1^T; W2^T; W3^T; W0^T], shape (4C, C).
    w_t = jnp.transpose(weight, (2, 1, 0)).astype(jnp.float32)       # (4, C_out, C_in)
    wcat = jnp.concatenate([w_t[1], w_t[2], w_t[3], w_t[0]], axis=0)
    b2d = bias.reshape(C, 1).astype(jnp.float32)

    # Per-tile halo corrections (tiny: nt columns per batch element).
    xr = xf.reshape(N, C, nt, TL)
    zero_col = jnp.zeros((N, C, 1), jnp.float32)
    prev_col = jnp.concatenate([zero_col, xr[:, :, :-1, -1]], axis=2)   # x[:, :, t*TL - 1]
    next_col = jnp.concatenate([xr[:, :, 1:, 0], zero_col], axis=2)     # x[:, :, (t+1)*TL]
    corr_prev = jnp.einsum('oi,nit->nto', w_t[3], prev_col)[..., None]  # (N, nt, C, 1)
    corr_next = jnp.einsum('oi,nit->nto', w_t[0], next_col)[..., None]  # (N, nt, C, 1)

    # 0/1 riffle (interleave) matrices, chunk-sized and grid-invariant.
    cols = jnp.arange(2 * CH)[None, :]
    rows = jnp.arange(CH)[:, None]
    s_even = (cols == 2 * rows).astype(jnp.float32)                     # (CH, 2CH)
    s_odd = (cols == 2 * rows + 1).astype(jnp.float32)                  # (CH, 2CH)

    return pl.pallas_call(
        _upsample1d_kernel,
        out_shape=jax.ShapeDtypeStruct((N, C, 2 * L), jnp.float32),
        grid=(nt, N),   # L-tile axis first so both TensorCores get work when N is small
        in_specs=[
            pl.BlockSpec((1, C, TL), lambda t, b: (b, 0, t)),
            pl.BlockSpec((4 * C, C), lambda t, b: (0, 0)),
            pl.BlockSpec((C, 1), lambda t, b: (0, 0)),
            pl.BlockSpec((1, 1, C, 1), lambda t, b: (b, t, 0, 0)),
            pl.BlockSpec((1, 1, C, 1), lambda t, b: (b, t, 0, 0)),
            pl.BlockSpec((CH, 2 * CH), lambda t, b: (0, 0)),
            pl.BlockSpec((CH, 2 * CH), lambda t, b: (0, 0)),
        ],
        out_specs=pl.BlockSpec((1, C, 2 * TL), lambda t, b: (b, 0, t)),
        compiler_params=pltpu.CompilerParams(
            dimension_semantics=("parallel", "parallel"),
            vmem_limit_bytes=48 * 1024 * 1024,
        ),
    )(xf, wcat, b2d, corr_prev, corr_next, s_even, s_odd)


def _reference_conv_transpose1d(x_ncl, weight, bias):
    # Transposed conv == lhs-dilated conv with flipped, IO-swapped kernel.
    K = weight.shape[2]
    pad = K - 1 - 1  # kernel=4, padding=1 -> effective pad 2 on each side
    w_oih = jnp.flip(weight, axis=2).transpose(1, 0, 2)   # (C_out, C_in, K)
    y = lax.conv_general_dilated(
        x_ncl, w_oih,
        window_strides=(1,),
        padding=[(pad, pad)],
        lhs_dilation=(2,),
        dimension_numbers=("NCH", "OIH", "NCH"),
    )
    return y + bias[None, :, None]


if __name__ == "__main__":
    key = jax.random.PRNGKey(0)
    kw, kb, kx1, kx2 = jax.random.split(key, 4)

    C = 8  # dim
    weight = jax.random.normal(kw, (C, C, 4), dtype=jnp.float32) * 0.1
    bias = jax.random.normal(kb, (C,), dtype=jnp.float32) * 0.1

    # Case 1: small spatial length (single L tile, TL == L, single riffle chunk).
    # Case 2: longer spatial length (exercises the L-tile grid, halo path, chunked riffle).
    for kx, (N, L) in ((kx1, (2, 16)), (kx2, (2, 1024))):
        x = jax.random.normal(kx, (N, C, L), dtype=jnp.float32)
        y = jax.block_until_ready(upsample1d(x, weight, bias))
        y_ref = _reference_conv_transpose1d(x, weight, bias)
        assert y.shape == (N, C, 2 * L), y.shape
        max_err = float(jnp.max(jnp.abs(y - y_ref)))
        assert max_err < 3e-3, (N, L, max_err)

    print("KERNEL_OK")
</pallas_src>

<mosaic_0001>
module attributes {stable_mosaic.version = 11 : i64} {
  func.func @_upsample1d_kernel(%arg0: i32, %arg1: i32, %arg2: memref<1x8x16xf32, #tpu.memory_space<vmem>>, %arg3: memref<32x8xf32, #tpu.memory_space<vmem>>, %arg4: memref<8x1xf32, #tpu.memory_space<vmem>>, %arg5: memref<1x1x8x1xf32, #tpu.memory_space<vmem>>, %arg6: memref<1x1x8x1xf32, #tpu.memory_space<vmem>>, %arg7: memref<16x32xf32, #tpu.memory_space<vmem>>, %arg8: memref<16x32xf32, #tpu.memory_space<vmem>>, %arg9: memref<1x8x32xf32, #tpu.memory_space<vmem>>) attributes {dimension_semantics = [#tpu.dimension_semantics<parallel>, #tpu.dimension_semantics<parallel>], iteration_bounds = array<i64: 1, 2>, scalar_prefetch = 0 : i64, scratch_operands = 0 : i64, tpu.core_type = #tpu.core_type<tc>, window_params = [{transform_indices = @transform_0, window_bounds = array<i64: 1, 8, 16>}, {pipeline_mode = #tpu.pipeline_mode<synchronous>, transform_indices = @transform_1, window_bounds = array<i64: 32, 8>}, {pipeline_mode = #tpu.pipeline_mode<synchronous>, transform_indices = @transform_2, window_bounds = array<i64: 8, 1>}, {transform_indices = @transform_3, window_bounds = array<i64: 1, 1, 8, 1>}, {transform_indices = @transform_4, window_bounds = array<i64: 1, 1, 8, 1>}, {pipeline_mode = #tpu.pipeline_mode<synchronous>, transform_indices = @transform_5, window_bounds = array<i64: 16, 32>}, {pipeline_mode = #tpu.pipeline_mode<synchronous>, transform_indices = @transform_6, window_bounds = array<i64: 16, 32>}, {transform_indices = @transform_7, window_bounds = array<i64: 1, 8, 32>}]} {
    %c0 = arith.constant 0 : index
    %c0_0 = arith.constant 0 : index
    %c0_1 = arith.constant 0 : index
    %0 = vector.load %arg2[%c0, %c0_0, %c0_1] : memref<1x8x16xf32, #tpu.memory_space<vmem>>, vector<1x8x16xf32>
    %1 = vector.shape_cast %0 : vector<1x8x16xf32> to vector<8x16xf32>
    %c0_2 = arith.constant 0 : index
    %c0_3 = arith.constant 0 : index
    %2 = vector.load %arg3[%c0_2, %c0_3] : memref<32x8xf32, #tpu.memory_space<vmem>>, vector<32x8xf32>
    %cst = arith.constant dense<0.000000e+00> : vector<32x16xf32>
    %3 = tpu.matmul %2, %1, %cst {dimension_numbers = #tpu.dot_dimension_numbers<[1], [0], [0], [1], [0, 0, 1, 1], [], []>} : vector<32x8xf32>, vector<8x16xf32>, vector<32x16xf32> -> vector<32x16xf32>
    %4 = vector.extract_strided_slice %3 {offsets = [0, 0], sizes = [8, 16], strides = [1, 1]} : vector<32x16xf32> to vector<8x16xf32>
    %5 = vector.extract_strided_slice %3 {offsets = [8, 0], sizes = [8, 16], strides = [1, 1]} : vector<32x16xf32> to vector<8x16xf32>
    %6 = vector.extract_strided_slice %3 {offsets = [16, 0], sizes = [8, 16], strides = [1, 1]} : vector<32x16xf32> to vector<8x16xf32>
    %7 = vector.extract_strided_slice %3 {offsets = [24, 0], sizes = [8, 16], strides = [1, 1]} : vector<32x16xf32> to vector<8x16xf32>
    %c0_4 = arith.constant 0 : index
    %c0_5 = arith.constant 0 : index
    %c0_6 = arith.constant 0 : index
    %c0_7 = arith.constant 0 : index
    %8 = vector.load %arg5[%c0_4, %c0_5, %c0_6, %c0_7] : memref<1x1x8x1xf32, #tpu.memory_space<vmem>>, vector<1x1x8x1xf32>
    %9 = vector.shape_cast %8 : vector<1x1x8x1xf32> to vector<8x1xf32>
    %c0_8 = arith.constant 0 : index
    %c0_9 = arith.constant 0 : index
    %c0_10 = arith.constant 0 : index
    %c0_11 = arith.constant 0 : index
    %10 = vector.load %arg6[%c0_8, %c0_9, %c0_10, %c0_11] : memref<1x1x8x1xf32, #tpu.memory_space<vmem>>, vector<1x1x8x1xf32>
    %11 = vector.shape_cast %10 : vector<1x1x8x1xf32> to vector<8x1xf32>
    %12 = vector.extract_strided_slice %6 {offsets = [0, 0], sizes = [8, 15], strides = [1, 1]} : vector<8x16xf32> to vector<8x15xf32>
    %13 = tpu.concatenate %9, %12 in 1 : vector<8x1xf32>, vector<8x15xf32> -> vector<8x16xf32>
    %14 = vector.extract_strided_slice %7 {offsets = [0, 1], sizes = [8, 15], strides = [1, 1]} : vector<8x16xf32> to vector<8x15xf32>
    %15 = tpu.concatenate %14, %11 in 1 : vector<8x15xf32>, vector<8x1xf32> -> vector<8x16xf32>
    %16 = arith.addf %4, %13 : vector<8x16xf32>
    %17 = arith.addf %5, %15 : vector<8x16xf32>
    %c0_12 = arith.constant 0 : index
    %c0_13 = arith.constant 0 : index
    %18 = vector.load %arg4[%c0_12, %c0_13] : memref<8x1xf32, #tpu.memory_space<vmem>>, vector<8x1xf32>
    %c0_14 = arith.constant 0 : index
    %c0_15 = arith.constant 0 : index
    %19 = vector.load %arg7[%c0_14, %c0_15] : memref<16x32xf32, #tpu.memory_space<vmem>>, vector<16x32xf32>
    %c0_16 = arith.constant 0 : index
    %c0_17 = arith.constant 0 : index
    %20 = vector.load %arg8[%c0_16, %c0_17] : memref<16x32xf32, #tpu.memory_space<vmem>>, vector<16x32xf32>
    %cst_18 = arith.constant dense<0.000000e+00> : vector<8x32xf32>
    %21 = tpu.matmul %16, %19, %cst_18 {dimension_numbers = #tpu.dot_dimension_numbers<[1], [0], [0], [1], [0, 0, 1, 1], [], []>} : vector<8x16xf32>, vector<16x32xf32>, vector<8x32xf32> -> vector<8x32xf32>
    %cst_19 = arith.constant dense<0.000000e+00> : vector<8x32xf32>
    %22 = tpu.matmul %17, %20, %cst_19 {dimension_numbers = #tpu.dot_dimension_numbers<[1], [0], [0], [1], [0, 0, 1, 1], [], []>} : vector<8x16xf32>, vector<16x32xf32>, vector<8x32xf32> -> vector<8x32xf32>
    %23 = arith.addf %21, %22 : vector<8x32xf32>
    %24 = vector.broadcast %18 : vector<8x1xf32> to vector<8x32xf32>
    %25 = arith.addf %23, %24 : vector<8x32xf32>
    %c0_20 = arith.constant 0 : index
    %c0_21 = arith.constant 0 : index
    %c0_22 = arith.constant 0 : index
    %26 = vector.load %arg9[%c0_20, %c0_21, %c0_22] : memref<1x8x32xf32, #tpu.memory_space<vmem>>, vector<1x8x32xf32>
    %27 = vector.shape_cast %26 : vector<1x8x32xf32> to vector<8x32xf32>
    %28 = vector.shape_cast %25 : vector<8x32xf32> to vector<1x8x32xf32>
    tpu.vector_store %arg9[%c0_20, %c0_21, %c0_22], %28 {strides = array<i32>} : memref<1x8x32xf32, #tpu.memory_space<vmem>>, vector<1x8x32xf32>,
    return
  }
  func.func @transform_0(%arg0: i32, %arg1: i32) -> (i32, i32, i32) {
    %c0_i32 = arith.constant 0 : i32
    %c0_i32_0 = arith.constant 0 : i32
    return %arg1, %c0_i32, %arg0 : i32, i32, i32
  }
  func.func @transform_1(%arg0: i32, %arg1: i32) -> (i32, i32) {
    %c0_i32 = arith.constant 0 : i32
    %c0_i32_0 = arith.constant 0 : i32
    %c0_i32_1 = arith.constant 0 : i32
    return %c0_i32, %c0_i32_0 : i32, i32
  }
  func.func @transform_2(%arg0: i32, %arg1: i32) -> (i32, i32) {
    %c0_i32 = arith.constant 0 : i32
    %c0_i32_0 = arith.constant 0 : i32
    %c0_i32_1 = arith.constant 0 : i32
    return %c0_i32, %c0_i32_0 : i32, i32
  }
  func.func @transform_3(%arg0: i32, %arg1: i32) -> (i32, i32, i32, i32) {
    %c0_i32 = arith.constant 0 : i32
    %c0_i32_0 = arith.constant 0 : i32
    %c0_i32_1 = arith.constant 0 : i32
    return %arg1, %arg0, %c0_i32, %c0_i32_0 : i32, i32, i32, i32
  }
  func.func @transform_4(%arg0: i32, %arg1: i32) -> (i32, i32, i32, i32) {
    %c0_i32 = arith.constant 0 : i32
    %c0_i32_0 = arith.constant 0 : i32
    %c0_i32_1 = arith.constant 0 : i32
    return %arg1, %arg0, %c0_i32, %c0_i32_0 : i32, i32, i32, i32
  }
  func.func @transform_5(%arg0: i32, %arg1: i32) -> (i32, i32) {
    %c0_i32 = arith.constant 0 : i32
    %c0_i32_0 = arith.constant 0 : i32
    %c0_i32_1 = arith.constant 0 : i32
    return %c0_i32, %c0_i32_0 : i32, i32
  }
  func.func @transform_6(%arg0: i32, %arg1: i32) -> (i32, i32) {
    %c0_i32 = arith.constant 0 : i32
    %c0_i32_0 = arith.constant 0 : i32
    %c0_i32_1 = arith.constant 0 : i32
    return %c0_i32, %c0_i32_0 : i32, i32
  }
  func.func @transform_7(%arg0: i32, %arg1: i32) -> (i32, i32, i32) {
    %c0_i32 = arith.constant 0 : i32
    %c0_i32_0 = arith.constant 0 : i32
    return %arg1, %c0_i32, %arg0 : i32, i32, i32
  }
}

</mosaic_0001>

<llo_original>
// kernel: tpu_custom_call.1
$region0: #{tpu_custom_call.1}
  #allocation0 [shape = 'u32[]', space=smem, size = 0x4, offset = 0x4, fixed_abs, tag = 'smem constant byte address 0x4 - core index']
  #allocation1 [shape = 'u32[72,128]{1,0:T(1,128)}', space=vmem, size = 0x9000, scoped, tag = 'internal scratch']
  %s0 = inlined_call_operand.vmem [shape: f32[2,8,16], index: 0, kind: input, shape index: {}]
  %s1 = inlined_call_operand.vmem [shape: f32[32,8], index: 1, kind: input, shape index: {}]
  %s2 = inlined_call_operand.vmem [shape: f32[8,1], index: 2, kind: input, shape index: {}]
  %s3 = inlined_call_operand.vmem [shape: f32[2,1,8,1], index: 3, kind: input, shape index: {}]
  %s4 = inlined_call_operand.vmem [shape: f32[2,1,8,1], index: 4, kind: input, shape index: {}]
  %s5 = inlined_call_operand.vmem [shape: f32[16,32], index: 5, kind: input, shape index: {}]
  %s6 = inlined_call_operand.vmem [shape: f32[16,32], index: 6, kind: input, shape index: {}]
  %s7 = inlined_call_operand.hbm [shape: f32[2,8,32], index: 7, kind: output, shape index: {}]
  %s8 = sld [smem:[#allocation0]]
  $region61: #{tpu_custom_call.1} parent=0
    _
  %s10 = ssub.s32 1, %s8
  %s11 = scalar_select 0, %s10, %s8
  $region1: #{tpu_custom_call.1} parent=0
    #allocation2 [shape = 'u8[8192]{0}', space=vmem, size = 0x2000, scoped, tag = 'output window, operand 0']
    #allocation3 [shape = 's32[2]{0}', space=sflag, size = 0x8, scoped, tag = 'scoped memory for tpu_custom_call.1']
    %12 = vsyncpa [#allocation3], 0
    %s13 = scalar_lea.sflag [#allocation3], 1
    %14 = vsyncpa %s13, 0
    loop: start=0, step=1, limit=4
    $region2: #{tpu_custom_call.1} parent=1 // loop_pre_header
      _
    $region3: #{tpu_custom_call.1} parent=1 // loop_header
      %s16 = sphi 0, %s20
      %p17 = scmp.ge.s32.totalorder %s16, 4
      %s23 = sphi 0, %s35
      %s24 = sphi 0, %s31
      %s25 = sphi 0, %s23
      %s26 = sphi 0, %s24
      %s27 = sphi 0, %s25
      %s28 = sphi 0, %s26
      %s40 = sphi 0, %s42
      %s43 = sphi 0, %s40
      %s44 = sphi 0, %s43
      %s60 = sphi 0, %s44
      %s64 = sphi 0, %s64
      %s66 = sphi 0, %s64
      %s67 = sphi 0, %s66
      %s81 = sphi 0, %s67
      %s85 = sphi 0, %s85
      %s87 = sphi 0, %s85
      %s88 = sphi 0, %s87
      %s102 = sphi 0, %s88
      %s110 = sphi 0, %s112
      %s113 = sphi 0, %s110
      %s114 = sphi 0, %s113
      %s130 = sphi 0, %s114
      %s138 = sphi 0, %s140
      %s141 = sphi 0, %s138
      %s142 = sphi 0, %s141
      %s158 = sphi 0, %s142
      %s162 = sphi 0, %s162
      %s164 = sphi 0, %s162
      %s165 = sphi 0, %s164
      %s179 = sphi 0, %s165
      %s183 = sphi 0, %s183
      %s185 = sphi 0, %s183
      %s186 = sphi 0, %s185
      %s200 = sphi 0, %s186
      %s208 = sphi 0, %s210
      %s211 = sphi 0, %s208
      %s212 = sphi 0, %s211
      %s228 = sphi 0, %s212
    $region4: #{tpu_custom_call.1} parent=1 // loop_header_branch
      %19 = sbr.rel (%p17) target = $region8
    $region5: #{tpu_custom_call.1} parent=1 // loop_body
      %s21 = ssub.s32 %s16, 1
      %s22 = ssub.s32 %s16, 2
      %s29 = sadd.s32 1, %s24
      %p30 = scmp.ge.s32.totalorder %s29, 2
      %s31 = scalar_select %p30, 0, %s29
      %s32 = sadd.s32 1, %s23
      %s33 = scalar_select %p30, %s32, %s23
      %p34 = scmp.ge.s32.totalorder %s33, 1
      %s35 = scalar_select %p34, 0, %s33
      %s36 = ssub.s32 %s24, %s31
      %s37 = ssub.s32 %s23, %s35
      %s38 = sor.u32 %s36, %s37
      %p39 = scmp.eq.s32.totalorder %s38, 0
      %s41 = sadd.s32 %s40, 1
      %s42 = scalar_select %p39, %s40, %s41
      %p45 = pneg %p39
      %p46 = scmp.eq.s32.totalorder %s16, 1
      %p47 = por %p45, %p46
      %p48 = scmp.ne.s32.totalorder %s40, %s43
      %p49 = scmp.eq.s32.totalorder %s16, 0
      %p50 = por %p48, %p49
      %p51 = scmp.ne.s32.totalorder %s40, %s43
      %p52 = scmp.eq.s32.totalorder %s21, 1
      %p53 = por %p51, %p52
      %p54 = scmp.ne.s32.totalorder %s43, %s44
      %p55 = scmp.eq.s32.totalorder %s21, 0
      %p56 = por %p54, %p55
      %p57 = scmp.ne.s32.totalorder %s43, %s44
      %p58 = scmp.eq.s32.totalorder %s22, 1
      %p59 = por %p57, %p58
      %p61 = scmp.ne.s32.totalorder %s44, %s60
      %p62 = scmp.eq.s32.totalorder %s22, 0
      %p63 = por %p61, %p62
      %s65 = sadd.s32 %s64, 1
      %p68 = scmp.eq.s32.totalorder %s16, 1
      %p69 = scmp.ne.s32.totalorder %s64, %s66
      %p70 = scmp.eq.s32.totalorder %s16, 0
      %p71 = por %p69, %p70
      %p72 = scmp.ne.s32.totalorder %s64, %s66
      %p73 = scmp.eq.s32.totalorder %s21, 1
      %p74 = por %p72, %p73
      %p75 = scmp.ne.s32.totalorder %s66, %s67
      %p76 = scmp.eq.s32.totalorder %s21, 0
      %p77 = por %p75, %p76
      %p78 = scmp.ne.s32.totalorder %s66, %s67
      %p79 = scmp.eq.s32.totalorder %s22, 1
      %p80 = por %p78, %p79
      %p82 = scmp.ne.s32.totalorder %s67, %s81
      %p83 = scmp.eq.s32.totalorder %s22, 0
      %p84 = por %p82, %p83
      %s86 = sadd.s32 %s85, 1
      %p89 = scmp.eq.s32.totalorder %s16, 1
      %p90 = scmp.ne.s32.totalorder %s85, %s87
      %p91 = scmp.eq.s32.totalorder %s16, 0
      %p92 = por %p90, %p91
      %p93 = scmp.ne.s32.totalorder %s85, %s87
      %p94 = scmp.eq.s32.totalorder %s21, 1
      %p95 = por %p93, %p94
      %p96 = scmp.ne.s32.totalorder %s87, %s88
      %p97 = scmp.eq.s32.totalorder %s21, 0
      %p98 = por %p96, %p97
      %p99 = scmp.ne.s32.totalorder %s87, %s88
      %p100 = scmp.eq.s32.totalorder %s22, 1
      %p101 = por %p99, %p100
      %p103 = scmp.ne.s32.totalorder %s88, %s102
      %p104 = scmp.eq.s32.totalorder %s22, 0
      %p105 = por %p103, %p104
      %s106 = ssub.s32 %s24, %s31
      %s107 = ssub.s32 %s23, %s35
      %s108 = sor.u32 %s106, %s107
      %p109 = scmp.eq.s32.totalorder %s108, 0
      %s111 = sadd.s32 %s110, 1
      %s112 = scalar_select %p109, %s110, %s111
      %p115 = pneg %p109
      %p116 = scmp.eq.s32.totalorder %s16, 1
      %p117 = por %p115, %p116
      %p118 = scmp.ne.s32.totalorder %s110, %s113
      %p119 = scmp.eq.s32.totalorder %s16, 0
      %p120 = por %p118, %p119
      %p121 = scmp.ne.s32.totalorder %s110, %s113
      %p122 = scmp.eq.s32.totalorder %s21, 1
      %p123 = por %p121, %p122
      %p124 = scmp.ne.s32.totalorder %s113, %s114
      %p125 = scmp.eq.s32.totalorder %s21, 0
      %p126 = por %p124, %p125
      %p127 = scmp.ne.s32.totalorder %s113, %s114
      %p128 = scmp.eq.s32.totalorder %s22, 1
      %p129 = por %p127, %p128
      %p131 = scmp.ne.s32.totalorder %s114, %s130
      %p132 = scmp.eq.s32.totalorder %s22, 0
      %p133 = por %p131, %p132
      %s134 = ssub.s32 %s24, %s31
      %s135 = ssub.s32 %s23, %s35
      %s136 = sor.u32 %s134, %s135
      %p137 = scmp.eq.s32.totalorder %s136, 0
      %s139 = sadd.s32 %s138, 1
      %s140 = scalar_select %p137, %s138, %s139
      %p143 = pneg %p137
      %p144 = scmp.eq.s32.totalorder %s16, 1
      %p145 = por %p143, %p144
      %p146 = scmp.ne.s32.totalorder %s138, %s141
      %p147 = scmp.eq.s32.totalorder %s16, 0
      %p148 = por %p146, %p147
      %p149 = scmp.ne.s32.totalorder %s138, %s141
      %p150 = scmp.eq.s32.totalorder %s21, 1
      %p151 = por %p149, %p150
      %p152 = scmp.ne.s32.totalorder %s141, %s142
      %p153 = scmp.eq.s32.totalorder %s21, 0
      %p154 = por %p152, %p153
      %p155 = scmp.ne.s32.totalorder %s141, %s142
      %p156 = scmp.eq.s32.totalorder %s22, 1
      %p157 = por %p155, %p156
      %p159 = scmp.ne.s32.totalorder %s142, %s158
      %p160 = scmp.eq.s32.totalorder %s22, 0
      %p161 = por %p159, %p160
      %s163 = sadd.s32 %s162, 1
      %p166 = scmp.eq.s32.totalorder %s16, 1
      %p167 = scmp.ne.s32.totalorder %s162, %s164
      %p168 = scmp.eq.s32.totalorder %s16, 0
      %p169 = por %p167, %p168
      %p170 = scmp.ne.s32.totalorder %s162, %s164
      %p171 = scmp.eq.s32.totalorder %s21, 1
      %p172 = por %p170, %p171
      %p173 = scmp.ne.s32.totalorder %s164, %s165
      %p174 = scmp.eq.s32.totalorder %s21, 0
      %p175 = por %p173, %p174
      %p176 = scmp.ne.s32.totalorder %s164, %s165
      %p177 = scmp.eq.s32.totalorder %s22, 1
      %p178 = por %p176, %p177
      %p180 = scmp.ne.s32.totalorder %s165, %s179
      %p181 = scmp.eq.s32.totalorder %s22, 0
      %p182 = por %p180, %p181
      %s184 = sadd.s32 %s183, 1
      %p187 = scmp.eq.s32.totalorder %s16, 1
      %p188 = scmp.ne.s32.totalorder %s183, %s185
      %p189 = scmp.eq.s32.totalorder %s16, 0
      %p190 = por %p188, %p189
      %p191 = scmp.ne.s32.totalorder %s183, %s185
      %p192 = scmp.eq.s32.totalorder %s21, 1
      %p193 = por %p191, %p192
      %p194 = scmp.ne.s32.totalorder %s185, %s186
      %p195 = scmp.eq.s32.totalorder %s21, 0
      %p196 = por %p194, %p195
      %p197 = scmp.ne.s32.totalorder %s185, %s186
      %p198 = scmp.eq.s32.totalorder %s22, 1
      %p199 = por %p197, %p198
      %p201 = scmp.ne.s32.totalorder %s186, %s200
      %p202 = scmp.eq.s32.totalorder %s22, 0
      %p203 = por %p201, %p202
      %s204 = ssub.s32 %s24, %s31
      %s205 = ssub.s32 %s23, %s35
      %s206 = sor.u32 %s204, %s205
      %p207 = scmp.eq.s32.totalorder %s206, 0
      %s209 = sadd.s32 %s208, 1
      %s210 = scalar_select %p207, %s208, %s209
      %p213 = pneg %p207
      %p214 = scmp.eq.s32.totalorder %s16, 1
      %p215 = por %p213, %p214
      %p216 = scmp.ne.s32.totalorder %s208, %s211
      %p217 = scmp.eq.s32.totalorder %s16, 0
      %p218 = por %p216, %p217
      %p219 = scmp.ne.s32.totalorder %s208, %s211
      %p220 = scmp.eq.s32.totalorder %s21, 1
      %p221 = por %p219, %p220
      %p222 = scmp.ne.s32.totalorder %s211, %s212
      %p223 = scmp.eq.s32.totalorder %s21, 0
      %p224 = por %p222, %p223
      %p225 = scmp.ne.s32.totalorder %s211, %s212
      %p226 = scmp.eq.s32.totalorder %s22, 1
      %p227 = por %p225, %p226
      %p229 = scmp.ne.s32.totalorder %s212, %s228
      %p230 = scmp.eq.s32.totalorder %s22, 0
      %p231 = por %p229, %p230
      %p232 = scmp.le.s32.totalorder 1, %s16
      %p233 = scmp.lt.s32.totalorder %s16, 3
      %p234 = pnand %p232, %p233
      %p235 = pneg %p234
      // Predicated region
      $region9: #{tpu_custom_call.1} parent=5 // pred_check
        _
      $region10: #{tpu_custom_call.1} parent=5 // pred_check_branch
        %237 = sbr.rel (%p234) target = $region12
      $region11: #{tpu_custom_call.1} parent=5 // pred_region
        %s238 = ssub.s32 %s16, 1
        // Predicated region
        $region13: #{tpu_custom_call.1} parent=11 // pred_check
          %p239 = pneg %p77
        $region14: #{tpu_custom_call.1} parent=11 // pred_check_branch
          %241 = sbr.rel (%p239) target = $region16
        $region15: #{tpu_custom_call.1} parent=11 // pred_region
          _
        $region16: #{tpu_custom_call.1} parent=11 // pred_fallthru
          _
        // Predicated region
        $region17: #{tpu_custom_call.1} parent=11 // pred_check
          %p242 = pneg %p98
        $region18: #{tpu_custom_call.1} parent=11 // pred_check_branch
          %244 = sbr.rel (%p242) target = $region20
        $region19: #{tpu_custom_call.1} parent=11 // pred_region
          _
        $region20: #{tpu_custom_call.1} parent=11 // pred_fallthru
          _
        // Predicated region
        $region21: #{tpu_custom_call.1} parent=11 // pred_check
          %p245 = pneg %p175
        $region22: #{tpu_custom_call.1} parent=11 // pred_check_branch
          %247 = sbr.rel (%p245) target = $region24
        $region23: #{tpu_custom_call.1} parent=11 // pred_region
          _
        $region24: #{tpu_custom_call.1} parent=11 // pred_fallthru
          _
        // Predicated region
        $region25: #{tpu_custom_call.1} parent=11 // pred_check
          %p248 = pneg %p196
        $region26: #{tpu_custom_call.1} parent=11 // pred_check_branch
          %250 = sbr.rel (%p248) target = $region28
        $region27: #{tpu_custom_call.1} parent=11 // pred_region
          _
        $region28: #{tpu_custom_call.1} parent=11 // pred_fallthru
          _
      $region12: #{tpu_custom_call.1} parent=5 // pred_fallthru
        _
      %p251 = scmp.lt.s32.totalorder %s16, 2
      // Predicated region
      $region29: #{tpu_custom_call.1} parent=5 // pred_check
        %p252 = pneg %p251
      $region30: #{tpu_custom_call.1} parent=5 // pred_check_branch
        %254 = sbr.rel (%p252) target = $region32
      $region31: #{tpu_custom_call.1} parent=5 // pred_region
        // Predicated region
        $region33: #{tpu_custom_call.1} parent=31 // pred_check
          %p255 = pneg %p50
        $region34: #{tpu_custom_call.1} parent=31 // pred_check_branch
          %257 = sbr.rel (%p255) target = $region36
        $region35: #{tpu_custom_call.1} parent=31 // pred_region
          %p258 = scmp.lt.s32.totalorder %s24, 1
          %s259 = scalar_select %p258, %s24, 1
          %p260 = scmp.lt.s32.totalorder %s23, 0
          %s261 = scalar_select %p260, %s23, 0
          %s262 = sadd.s32 %s261, %s259
          %s263 = smul.addr %s262, 8
          %s264 = scalar_lea.vmem %s0, %s263
        $region36: #{tpu_custom_call.1} parent=31 // pred_fallthru
          _
        // Predicated region
        $region37: #{tpu_custom_call.1} parent=31 // pred_check
          %p265 = pneg %p120
        $region38: #{tpu_custom_call.1} parent=31 // pred_check_branch
          %267 = sbr.rel (%p265) target = $region40
        $region39: #{tpu_custom_call.1} parent=31 // pred_region
          %p268 = scmp.lt.s32.totalorder %s24, 1
          %s269 = scalar_select %p268, %s24, 1
          %p270 = scmp.lt.s32.totalorder %s23, 0
          %s271 = scalar_select %p270, %s23, 0
          %s272 = sadd.s32 %s271, %s269
          %s273 = smul.addr %s272, 8
          %s274 = scalar_lea.vmem %s3, %s273
        $region40: #{tpu_custom_call.1} parent=31 // pred_fallthru
          _
        // Predicated region
        $region41: #{tpu_custom_call.1} parent=31 // pred_check
          %p275 = pneg %p148
        $region42: #{tpu_custom_call.1} parent=31 // pred_check_branch
          %277 = sbr.rel (%p275) target = $region44
        $region43: #{tpu_custom_call.1} parent=31 // pred_region
          %p278 = scmp.lt.s32.totalorder %s24, 1
          %s279 = scalar_select %p278, %s24, 1
          %p280 = scmp.lt.s32.totalorder %s23, 0
          %s281 = scalar_select %p280, %s23, 0
          %s282 = sadd.s32 %s281, %s279
          %s283 = smul.addr %s282, 8
          %s284 = scalar_lea.vmem %s4, %s283
        $region44: #{tpu_custom_call.1} parent=31 // pred_fallthru
          _
      $region32: #{tpu_custom_call.1} parent=5 // pred_fallthru
        _
      %p285 = scmp.le.s32.totalorder 1, %s16
      %p286 = scmp.lt.s32.totalorder %s16, 3
      %p287 = pnand %p285, %p286
      %p288 = pneg %p287
      // Predicated region
      $region45: #{tpu_custom_call.1} parent=5 // pred_check
        _
      $region46: #{tpu_custom_call.1} parent=5 // pred_check_branch
        %290 = sbr.rel (%p287) target = $region48
      $region47: #{tpu_custom_call.1} parent=5 // pred_region
        %s291 = ssub.s32 %s16, 1
        %p292 = scmp.lt.s32.totalorder %s26, 1
        %s293 = scalar_select %p292, %s26, 1
        %p294 = scmp.lt.s32.totalorder %s25, 0
        %s295 = scalar_select %p294, %s25, 0
        %s296 = sadd.s32 %s295, %s293
        %s297 = smul.addr %s296, 8
        %s298 = scalar_lea.vmem %s0, %s297
        %p299 = pneg %p56
        %p300 = pneg %p53
        %p301 = pneg %p77
        %p302 = pneg %p74
        %p303 = pneg %p98
        %p304 = pneg %p95
        %p305 = scmp.lt.s32.totalorder %s26, 1
        %s306 = scalar_select %p305, %s26, 1
        %p307 = scmp.lt.s32.totalorder %s25, 0
        %s308 = scalar_select %p307, %s25, 0
        %s309 = sadd.s32 %s308, %s306
        %s310 = smul.addr %s309, 8
        %s311 = scalar_lea.vmem %s3, %s310
        %p312 = pneg %p126
        %p313 = pneg %p123
        %p314 = scmp.lt.s32.totalorder %s26, 1
        %s315 = scalar_select %p314, %s26, 1
        %p316 = scmp.lt.s32.totalorder %s25, 0
        %s317 = scalar_select %p316, %s25, 0
        %s318 = sadd.s32 %s317, %s315
        %s319 = smul.addr %s318, 8
        %s320 = scalar_lea.vmem %s4, %s319
        %p321 = pneg %p154
        %p322 = pneg %p151
        %p323 = pneg %p175
        %p324 = pneg %p172
        %p325 = pneg %p196
        %p326 = pneg %p193
        %p327 = pneg %p224
        %p328 = pneg %p221
        %s329 = sand.u32 %s211, 1
        %s330 = scalar_lea.sflag [#allocation3], %s329
        %s331 = sand.u32 %s211, 1
        %s332 = smul.addr %s331, 8
        %s333 = scalar_lea.vmem [#allocation2], %s332
        %p334 = scmp.lt.s32.totalorder %s26, 1
        %s335 = scalar_select %p334, %s26, 1
        %p336 = scmp.lt.s32.totalorder %s25, 0
        %s337 = scalar_select %p336, %s25, 0
        %s338 = sadd.s32 %s337, %s335
        %s339 = smul.addr %s338, 8
        %s340 = scalar_lea.vmem %s0, %s339
        %p341 = scmp.lt.s32.totalorder %s26, 1
        %s342 = scalar_select %p341, %s26, 1
        %p343 = scmp.lt.s32.totalorder %s25, 0
        %s344 = scalar_select %p343, %s25, 0
        %s345 = sadd.s32 %s344, %s342
        %s346 = smul.addr %s345, 8
        %s347 = scalar_lea.vmem %s3, %s346
        %p348 = scmp.lt.s32.totalorder %s26, 1
        %s349 = scalar_select %p348, %s26, 1
        %p350 = scmp.lt.s32.totalorder %s25, 0
        %s351 = scalar_select %p350, %s25, 0
        %s352 = sadd.s32 %s351, %s349
        %s353 = smul.addr %s352, 8
        %s354 = scalar_lea.vmem %s4, %s353
        %v355 = vld [vmem:[%s340] sm:$0xff]
        %v356 = vld [vmem:[%s1] sm:$0xff]
        %v357 = vld [vmem:[%s1 + $0x8] sm:$0xff]
        %v358 = vld [vmem:[%s1 + $0x10] sm:$0xff]
        %v359 = vld [vmem:[%s1 + $0x18] sm:$0xff]
        %vm360 = vcmask 64512
        %v362 = vsel %vm360, %v356, 0
        %v365 = vsel %vm360, %v357, 0
        %v368 = vsel %vm360, %v358, 0
        %v371 = vsel %vm360, %v359, 0
        %373 = vmatpush.msra.mxu0 0.0
        %374 = vmatpush.msra.mxu0 0.0
        %375 = vmatpush.msra.mxu0 0.0
        %376 = vmatpush.msra.mxu0 0.0
        %377 = vmatpush.msra.mxu0 0.0
        %378 = vmatpush.msra.mxu0 0.0
        %379 = vmatpush.msra.mxu0 0.0
        %380 = vmatpush.msra.mxu0 0.0
        %381 = vmatpush.msra.mxu0 0.0
        %382 = vmatpush.msra.mxu0 0.0
        %383 = vmatpush.msra.mxu0 0.0
        %384 = vmatpush.msra.mxu0 0.0
        %385 = vmatpush.msra.mxu0 0.0
        %386 = vmatpush.msra.mxu0 0.0
        %387 = vmatpush.msra.mxu0 0.0
        %388 = vmatpush.msra.mxu0 %v355
        %389 = vmatmul.f32.gmra.mxu0 %v362
        %v390 = vpop.f32.mrf.mxu0
        %v391 = vadd.f32 0.0, %v390
        %392 = vmatmul.f32.gmra.mxu0 %v365
        %v393 = vpop.f32.mrf.mxu0
        %v394 = vadd.f32 0.0, %v393
        %395 = vmatmul.f32.gmra.mxu0 %v368
        %v396 = vpop.f32.mrf.mxu0
        %v397 = vadd.f32 0.0, %v396
        %398 = vmatmul.f32.gmra.mxu0 %v371
        %v399 = vpop.f32.mrf.mxu0
        %v400 = vadd.f32 0.0, %v399
        %401 = vdwg.mxu0
        %v402 = vld [vmem:[%s347] sm:$0xff]
        %v403 = vld [vmem:[%s354] sm:$0xff]
        %405 = vrot.lane.b32.xlu0 %v397, 1
        %v406 = vpop.permute.xlu0 %405
        %vm408 = vcmask 7168
        %v409 = vsel %vm408, %v402, %v406
        %411 = vrot.lane.b32.xlu0 %v400, 127
        %v412 = vpop.permute.xlu0 %411
        %415 = vrot.lane.b32.xlu0 %v403, 15
        %v416 = vpop.permute.xlu0 %415
        %vm418 = vcmask 121856
        %v419 = vsel %vm418, %v412, %v416
        %v420 = vadd.f32 %v391, %v409
        %v421 = vadd.f32 %v394, %v419
        %v422 = vld [vmem:[%s2] sm:$0xff]
        %v423 = vld [vmem:[%s5] sm:$0xff]
        %v424 = vld [vmem:[%s5 + $0x8] sm:$0xff]
        %v425 = vld [vmem:[%s6] sm:$0xff]
        %v426 = vld [vmem:[%s6 + $0x8] sm:$0xff]
        %vm427 = vcmask 130048
        %v429 = vsel %vm427, %v421, 0
        %431 = vmatpush.msra.mxu0 0.0
        %432 = vmatpush.msra.mxu0 0.0
        %433 = vmatpush.msra.mxu0 0.0
        %434 = vmatpush.msra.mxu0 0.0
        %435 = vmatpush.msra.mxu0 0.0
        %436 = vmatpush.msra.mxu0 0.0
        %437 = vmatpush.msra.mxu0 0.0
        %438 = vmatpush.msra.mxu0 0.0
        %439 = vmatpush.msra.mxu0 0.0
        %440 = vmatpush.msra.mxu0 0.0
        %441 = vmatpush.msra.mxu0 0.0
        %442 = vmatpush.msra.mxu0 0.0
        %443 = vmatpush.msra.mxu0 0.0
        %444 = vmatpush.msra.mxu0 0.0
        %445 = vmatpush.msra.mxu0 %v426
        %446 = vmatpush.msra.mxu0 %v425
        %447 = vmatmul.f32.gmra.mxu0 %v429
        %v448 = vpop.f32.mrf.mxu0
        %v449 = vadd.f32 0.0, %v448
        %450 = vdwg.mxu0
        %v452 = vsel %vm427, %v420, 0
        %454 = vmatpush.msra.mxu0 0.0
        %455 = vmatpush.msra.mxu0 0.0
        %456 = vmatpush.msra.mxu0 0.0
        %457 = vmatpush.msra.mxu0 0.0
        %458 = vmatpush.msra.mxu0 0.0
        %459 = vmatpush.msra.mxu0 0.0
        %460 = vmatpush.msra.mxu0 0.0
        %461 = vmatpush.msra.mxu0 0.0
        %462 = vmatpush.msra.mxu0 0.0
        %463 = vmatpush.msra.mxu0 0.0
        %464 = vmatpush.msra.mxu0 0.0
        %465 = vmatpush.msra.mxu0 0.0
        %466 = vmatpush.msra.mxu0 0.0
        %467 = vmatpush.msra.mxu0 0.0
        %468 = vmatpush.msra.mxu0 %v424
        %469 = vmatpush.msra.mxu0 %v423
        %470 = vmatmul.f32.gmra.mxu0 %v452
        %v471 = vpop.f32.mrf.mxu0
        %v472 = vadd.f32 %v449, %v471
        %473 = vdwg.mxu0
        %475 = vset.pattern.permute.xlu0 0
        %476 = vperm.xlu0 %475, %v422
        %v477 = vpop.permute.xlu0 %476
        %v479 = vadd.f32 %v472, %v477
        %vm480 = vcmask 261120
        %481 = vst.msk [vmem:[%s333] sm:$0xff] %vm480, %v479
        %s482 = sand.u32 %s211, 1
        %s483 = scalar_lea.sflag [#allocation3], %s482
        %s484 = sand.u32 %s211, 1
        %s485 = smul.addr %s484, 8
        %s486 = scalar_lea.vmem [#allocation2], %s485
        // Predicated region
        $region49: #{tpu_custom_call.1} parent=47 // pred_check
          %p487 = pneg %p221
        $region50: #{tpu_custom_call.1} parent=47 // pred_check_branch
          %489 = sbr.rel (%p487) target = $region52
        $region51: #{tpu_custom_call.1} parent=47 // pred_region
          %491 = vsyncadd %s483, 0
          %s492 = sadd.s32 %s25, %s26
          %s493 = smul.addr %s492, 8
          %s494 = scalar_lea.hbm %s7, %s493
          %s496 = sshll.u32 %s486, 4
          %s497 = int_to_ptr.vmem [resolvable:$true] %s496
          %s498 = sshll.u32 %s494, 4
          %s499 = int_to_ptr.hbm [resolvable:$true] %s498
          %501 = dma.vmem_to_hbm [thread:$0]  %s497, 128, %s499, %s483
        $region52: #{tpu_custom_call.1} parent=47 // pred_fallthru
          _
      $region48: #{tpu_custom_call.1} parent=5 // pred_fallthru
        _
      %p502 = scmp.le.s32.totalorder 2, %s16
      // Predicated region
      $region53: #{tpu_custom_call.1} parent=5 // pred_check
        %p503 = pneg %p502
      $region54: #{tpu_custom_call.1} parent=5 // pred_check_branch
        %505 = sbr.rel (%p503) target = $region56
      $region55: #{tpu_custom_call.1} parent=5 // pred_region
        %s506 = ssub.s32 %s16, 2
        // Predicated region
        $region57: #{tpu_custom_call.1} parent=55 // pred_check
          %p507 = pneg %p227
        $region58: #{tpu_custom_call.1} parent=55 // pred_check_branch
          %509 = sbr.rel (%p507) target = $region60
        $region59: #{tpu_custom_call.1} parent=55 // pred_region
          %s510 = sand.u32 %s212, 1
          %s511 = scalar_lea.sflag [#allocation3], %s510
          %s512 = sand.u32 %s212, 1
          %s513 = smul.addr %s512, 8
          %s514 = scalar_lea.vmem [#allocation2], %s513
          %516 = dma.done %s511, 128
        $region60: #{tpu_custom_call.1} parent=55 // pred_fallthru
          _
      $region56: #{tpu_custom_call.1} parent=5 // pred_fallthru
        _
    $region6: #{tpu_custom_call.1} parent=1 // loop_footer
      %s20 = sadd.s32 1, %s16
    $region7: #{tpu_custom_call.1} parent=1 // loop_footer_branch
      %15 = sbr.rel target = $region3
    $region8: #{tpu_custom_call.1} parent=1 // loop_exit
      _
    %517 = vsyncpa [#allocation3], 1
    %s518 = scalar_lea.sflag [#allocation3], 1
    %519 = vsyncpa %s518, 1

</llo_original>
